<compile_context>
chip_gen: v6e
topology: v6e:2x2x1
jax: 0.10.0
libtpu: 0.0.40
codegen_flags: <defaults>
</compile_context>

<pallas_src>
import functools

import jax
import jax.numpy as jnp
from jax.experimental import pallas as pl
from jax.experimental.pallas import tpu as pltpu


def _round_up(x, m):
    return ((x + m - 1) // m) * m


def _tile_entropy(x):
    """Per-column entropy of a (C, TN) f32 logits tile -> (1, TN).

    entropy = log(s) - sum_c(ex_c * (x_c - m)) / s,  ex = exp(x - m), s = sum(ex).
    """
    m = jnp.max(x, axis=0, keepdims=True)                # (1, TN)
    xm = x - m
    ex = jnp.exp(xm)
    s = jnp.sum(ex, axis=0, keepdims=True)               # (1, TN)
    num = jnp.sum(ex * xm, axis=0, keepdims=True)        # (1, TN)
    # approx=False keeps full f32 accuracy; divide is negligible in this mem-bound kernel.
    return jnp.log(s) - num * pl.reciprocal(s, approx=False)


def _entropy_kernel(x_ref, out_ref, acc_ref, *, hw, tn):
    """Unweighted variant.  x_ref: (1, C, TN); out_ref: (1, 1, 1); acc_ref: (1, TN)."""
    t = pl.program_id(1)

    @pl.when(t == 0)
    def _():
        acc_ref[...] = jnp.zeros_like(acc_ref)

    ent = _tile_entropy(x_ref[0].astype(jnp.float32))     # (1, TN)
    if hw % tn != 0:                                      # mask padded lanes of last tile
        col = jax.lax.broadcasted_iota(jnp.int32, (1, tn), 1) + t * tn
        ent = jnp.where(col < hw, ent, 0.0)
    acc_ref[...] += ent

    @pl.when(t == pl.num_programs(1) - 1)
    def _():
        out_ref[0] = jnp.sum(acc_ref[...], axis=1, keepdims=True)


def _entropy_kernel_weighted(x_ref, w_ref, out_ref, acc_ref, *, hw, tn):
    """Weighted variant.  w_ref: (1, 1, TN) lane-dense per-pixel weights."""
    t = pl.program_id(1)

    @pl.when(t == 0)
    def _():
        acc_ref[...] = jnp.zeros_like(acc_ref)

    ent = _tile_entropy(x_ref[0].astype(jnp.float32))     # (1, TN)
    ent = ent * w_ref[0].astype(jnp.float32)              # weight before masking
    if hw % tn != 0:
        col = jax.lax.broadcasted_iota(jnp.int32, (1, tn), 1) + t * tn
        ent = jnp.where(col < hw, ent, 0.0)
    acc_ref[...] += ent

    @pl.when(t == pl.num_programs(1) - 1)
    def _():
        out_ref[0] = jnp.sum(acc_ref[...], axis=1, keepdims=True)


def entropy_loss(logits, weights=None):
    """EntropyLoss(reduction='mean') forward.

    logits:  (N, C, H, W) float array (NCHW, same as the PyTorch module).
    weights: optional, squeezes/broadcasts to (N, H, W).
    Returns a scalar float32.
    """
    N, C, H, W = logits.shape
    HW = H * W
    x = logits.reshape(N, C, HW)                          # free view, native NCHW order

    # Lane tile: multiple of 128, capped at 4096 (tile bytes = C*TN*4, KB-scale on all gens).
    TN = min(4096, _round_up(HW, 128))
    n_t = pl.cdiv(HW, TN)
    grid = (N, n_t)

    x_spec = pl.BlockSpec((1, C, TN), lambda n, t: (n, 0, t))
    out_spec = pl.BlockSpec((1, 1, 1), lambda n, t: (n, 0, 0))   # resident per batch row
    out_shape = jax.ShapeDtypeStruct((N, 1, 1), jnp.float32)
    scratch = [pltpu.VMEM((1, TN), jnp.float32)]
    cparams = pltpu.CompilerParams(
        dimension_semantics=("parallel", "arbitrary"),    # batch across TCs, tiles reduce
    )

    if weights is None:
        kernel = functools.partial(_entropy_kernel, hw=HW, tn=TN)
        partials = pl.pallas_call(
            kernel,
            out_shape=out_shape,
            grid_spec=pltpu.PrefetchScalarGridSpec(
                num_scalar_prefetch=0,
                grid=grid,
                in_specs=[x_spec],
                out_specs=out_spec,
                scratch_shapes=scratch,
            ),
            compiler_params=cparams,
        )(x)
    else:
        # Matches torch.squeeze(sum_entropy) * torch.squeeze(weights) for (N, H, W)-shaped
        # (or broadcastable) weights; laid out lane-dense to match the logits tiling.
        w = jnp.broadcast_to(jnp.squeeze(weights), (N, H, W))
        w = w.reshape(N, 1, HW).astype(jnp.float32)
        w_spec = pl.BlockSpec((1, 1, TN), lambda n, t: (n, 0, t))
        kernel = functools.partial(_entropy_kernel_weighted, hw=HW, tn=TN)
        partials = pl.pallas_call(
            kernel,
            out_shape=out_shape,
            grid_spec=pltpu.PrefetchScalarGridSpec(
                num_scalar_prefetch=0,
                grid=grid,
                in_specs=[x_spec, w_spec],
                out_specs=out_spec,
                scratch_shapes=scratch,
            ),
            compiler_params=cparams,
        )(x, w)

    return jnp.sum(partials) / jnp.float32(N * HW)


def _entropy_loss_ref(logits, weights=None):
    """Pure-JAX reference (mirrors the PyTorch module, reduction='mean')."""
    logp = jax.nn.log_softmax(logits, axis=1)
    p = jax.nn.softmax(logits, axis=1)
    ent = jnp.sum(-p * logp, axis=1)
    if weights is not None:
        ent = jnp.squeeze(ent) * jnp.squeeze(weights)
    return jnp.mean(ent)


if __name__ == "__main__":
    key = jax.random.PRNGKey(0)
    k1, k2 = jax.random.split(key)

    N, C, H, W = 2, 4, 16, 16
    logits = jax.random.normal(k1, (N, C, H, W), dtype=jnp.float32) * 3.0
    weights = jax.random.uniform(k2, (N, H, W), dtype=jnp.float32)

    # No-weights path (matches EntropyLoss()(logits))
    out = jax.block_until_ready(entropy_loss(logits))
    ref = _entropy_loss_ref(logits)
    assert jnp.allclose(out, ref, atol=1e-5, rtol=1e-5), (out, ref)

    # Weighted path (matches EntropyLoss()(logits, weights))
    out_w = jax.block_until_ready(entropy_loss(logits, weights))
    ref_w = _entropy_loss_ref(logits, weights)
    assert jnp.allclose(out_w, ref_w, atol=1e-5, rtol=1e-5), (out_w, ref_w)

    print("KERNEL_OK")
</pallas_src>

<mosaic_0001>
module attributes {stable_mosaic.version = 11 : i64} {
  func.func @_entropy_kernel(%arg0: i32, %arg1: i32, %arg2: memref<1x4x256xf32, #tpu.memory_space<vmem>>, %arg3: memref<1x1x1xf32, #tpu.memory_space<vmem>>, %arg4: memref<1x256xf32, #tpu.memory_space<vmem>>) attributes {dimension_semantics = [#tpu.dimension_semantics<parallel>, #tpu.dimension_semantics<arbitrary>], iteration_bounds = array<i64: 2, 1>, scalar_prefetch = 0 : i64, scratch_operands = 1 : i64, tpu.core_type = #tpu.core_type<tc>, window_params = [{transform_indices = @transform_0, window_bounds = array<i64: 1, 4, 256>}, {transform_indices = @transform_1, window_bounds = array<i64: 1, 1, 1>}]} {
    %c0_i32 = arith.constant 0 : i32
    %0 = arith.cmpi eq, %arg1, %c0_i32 : i32
    %1 = arith.extui %0 : i1 to i32
    %c0_i32_0 = arith.constant 0 : i32
    %2 = arith.cmpi ne, %1, %c0_i32_0 : i32
    scf.if %2 {
      %cst_11 = arith.constant 0.000000e+00 : f32
      %25 = vector.broadcast %cst_11 : f32 to vector<1x256xf32>
      %c0_12 = arith.constant 0 : index
      %c0_13 = arith.constant 0 : index
      %26 = vector.load %arg4[%c0_12, %c0_13] : memref<1x256xf32, #tpu.memory_space<vmem>>, vector<1x256xf32>
      tpu.vector_store %arg4[%c0_12, %c0_13], %25 {strides = array<i32>} : memref<1x256xf32, #tpu.memory_space<vmem>>, vector<1x256xf32>,
    } else {
    }
    %c0 = arith.constant 0 : index
    %c0_1 = arith.constant 0 : index
    %c0_2 = arith.constant 0 : index
    %3 = vector.load %arg2[%c0, %c0_1, %c0_2] : memref<1x4x256xf32, #tpu.memory_space<vmem>>, vector<1x4x256xf32>
    %4 = vector.shape_cast %3 : vector<1x4x256xf32> to vector<4x256xf32>
    %cst = arith.constant dense<0xFF800000> : vector<256xf32>
    %5 = vector.multi_reduction <maximumf>, %4, %cst [0] : vector<4x256xf32> to vector<256xf32>
    %6 = vector.shape_cast %5 : vector<256xf32> to vector<1x256xf32>
    %7 = vector.broadcast %6 : vector<1x256xf32> to vector<4x256xf32>
    %8 = arith.subf %4, %7 : vector<4x256xf32>
    %9 = math.exp %8 : vector<4x256xf32>
    %cst_3 = arith.constant dense<0.000000e+00> : vector<256xf32>
    %10 = vector.multi_reduction <add>, %9, %cst_3 [0] : vector<4x256xf32> to vector<256xf32>
    %11 = vector.shape_cast %10 : vector<256xf32> to vector<1x256xf32>
    %12 = arith.mulf %9, %8 : vector<4x256xf32>
    %cst_4 = arith.constant dense<0.000000e+00> : vector<256xf32>
    %13 = vector.multi_reduction <add>, %12, %cst_4 [0] : vector<4x256xf32> to vector<256xf32>
    %14 = vector.shape_cast %13 : vector<256xf32> to vector<1x256xf32>
    %15 = math.log %11 : vector<1x256xf32>
    %16 = tpu.reciprocal %11 : vector<1x256xf32> -> vector<1x256xf32>
    %17 = arith.mulf %14, %16 : vector<1x256xf32>
    %18 = arith.subf %15, %17 : vector<1x256xf32>
    %c0_5 = arith.constant 0 : index
    %c0_6 = arith.constant 0 : index
    %19 = vector.load %arg4[%c0_5, %c0_6] : memref<1x256xf32, #tpu.memory_space<vmem>>, vector<1x256xf32>
    %20 = arith.addf %19, %18 : vector<1x256xf32>
    %c0_7 = arith.constant 0 : index
    %c0_8 = arith.constant 0 : index
    %21 = vector.load %arg4[%c0_7, %c0_8] : memref<1x256xf32, #tpu.memory_space<vmem>>, vector<1x256xf32>
    tpu.vector_store %arg4[%c0_7, %c0_8], %20 {strides = array<i32>} : memref<1x256xf32, #tpu.memory_space<vmem>>, vector<1x256xf32>,
    %c0_i32_9 = arith.constant 0 : i32
    %22 = arith.cmpi eq, %arg1, %c0_i32_9 : i32
    %23 = arith.extui %22 : i1 to i32
    %c0_i32_10 = arith.constant 0 : i32
    %24 = arith.cmpi ne, %23, %c0_i32_10 : i32
    scf.if %24 {
      %c0_11 = arith.constant 0 : index
      %c0_12 = arith.constant 0 : index
      %25 = vector.load %arg4[%c0_11, %c0_12] : memref<1x256xf32, #tpu.memory_space<vmem>>, vector<1x256xf32>
      %cst_13 = arith.constant dense<0.000000e+00> : vector<1xf32>
      %26 = vector.multi_reduction <add>, %25, %cst_13 [1] : vector<1x256xf32> to vector<1xf32>
      %27 = vector.shape_cast %26 : vector<1xf32> to vector<1x1xf32>
      %c0_14 = arith.constant 0 : index
      %c0_15 = arith.constant 0 : index
      %c0_16 = arith.constant 0 : index
      %28 = vector.load %arg3[%c0_14, %c0_15, %c0_16] : memref<1x1x1xf32, #tpu.memory_space<vmem>>, vector<1x1x1xf32>
      %29 = vector.shape_cast %28 : vector<1x1x1xf32> to vector<1x1xf32>
      %30 = vector.shape_cast %27 : vector<1x1xf32> to vector<1x1x1xf32>
      tpu.vector_store %arg3[%c0_14, %c0_15, %c0_16], %30 {strides = array<i32>} : memref<1x1x1xf32, #tpu.memory_space<vmem>>, vector<1x1x1xf32>,
    } else {
    }
    return
  }
  func.func @transform_0(%arg0: i32, %arg1: i32) -> (i32, i32, i32) {
    %c0_i32 = arith.constant 0 : i32
    %c0_i32_0 = arith.constant 0 : i32
    return %arg0, %c0_i32, %arg1 : i32, i32, i32
  }
  func.func @transform_1(%arg0: i32, %arg1: i32) -> (i32, i32, i32) {
    %c0_i32 = arith.constant 0 : i32
    %c0_i32_0 = arith.constant 0 : i32
    %c0_i32_1 = arith.constant 0 : i32
    return %arg0, %c0_i32, %c0_i32_0 : i32, i32, i32
  }
}

</mosaic_0001>

<llo_original>
// kernel: tpu_custom_call.1
$region0: #{tpu_custom_call.1}
  #allocation0 [shape = 'u32[]', space=smem, size = 0x4, offset = 0x4, fixed_abs, tag = 'smem constant byte address 0x4 - core index']
  #allocation1 [shape = 'u32[144,128]{1,0:T(1,128)}', space=vmem, size = 0x12000, scoped, tag = 'internal scratch']
  #allocation2 [shape = 'f32[1,256]{1,0:T(1,128)}', space=vmem, size = 0x400, scoped, tag = 'scratch operand']
  %s0 = inlined_call_operand.hbm [shape: f32[2,4,256], index: 0, kind: input, shape index: {}]
  %s1 = inlined_call_operand.vmem [shape: f32[2,1,1], index: 1, kind: output, shape index: {}]
  %s2 = sld [smem:[#allocation0]]
  $region49: #{tpu_custom_call.1} parent=0
    _
  %s4 = ssub.s32 1, %s2
  %s5 = scalar_select 0, %s4, %s2
  $region1: #{tpu_custom_call.1} parent=0
    #allocation3 [shape = 'u8[8192]{0}', space=vmem, size = 0x2000, scoped, tag = 'input window, operand 0']
    #allocation4 [shape = 's32[2]{0}', space=sflag, size = 0x8, scoped, tag = 'scoped memory for tpu_custom_call.1']
    %6 = vsyncpa [#allocation4], 0
    %s7 = scalar_lea.sflag [#allocation4], 1
    %8 = vsyncpa %s7, 0
    loop: start=0, step=1, limit=4
    $region2: #{tpu_custom_call.1} parent=1 // loop_pre_header
      _
    $region3: #{tpu_custom_call.1} parent=1 // loop_header
      %s10 = sphi 0, %s14
      %p11 = scmp.ge.s32.totalorder %s10, 4
      %s17 = sphi 0, %s29
      %s18 = sphi 0, %s25
      %s19 = sphi 0, %s17
      %s20 = sphi 0, %s18
      %s21 = sphi 0, %s19
      %s22 = sphi 0, %s20
      %s34 = sphi 0, %s36
      %s37 = sphi 0, %s34
      %s38 = sphi 0, %s37
      %s54 = sphi 0, %s38
      %s60 = sphi 0, %s62
      %s63 = sphi 0, %s60
      %s64 = sphi 0, %s63
      %s80 = sphi 0, %s64
    $region4: #{tpu_custom_call.1} parent=1 // loop_header_branch
      %13 = sbr.rel (%p11) target = $region8
    $region5: #{tpu_custom_call.1} parent=1 // loop_body
      %s15 = ssub.s32 %s10, 1
      %s16 = ssub.s32 %s10, 2
      %s23 = sadd.s32 1, %s18
      %p24 = scmp.ge.s32.totalorder %s23, 1
      %s25 = scalar_select %p24, 0, %s23
      %s26 = sadd.s32 1, %s17
      %s27 = scalar_select %p24, %s26, %s17
      %p28 = scmp.ge.s32.totalorder %s27, 2
      %s29 = scalar_select %p28, 0, %s27
      %s30 = ssub.s32 %s17, %s29
      %s31 = ssub.s32 %s18, %s25
      %s32 = sor.u32 %s30, %s31
      %p33 = scmp.eq.s32.totalorder %s32, 0
      %s35 = sadd.s32 %s34, 1
      %s36 = scalar_select %p33, %s34, %s35
      %p39 = pneg %p33
      %p40 = scmp.eq.s32.totalorder %s10, 1
      %p41 = por %p39, %p40
      %p42 = scmp.ne.s32.totalorder %s34, %s37
      %p43 = scmp.eq.s32.totalorder %s10, 0
      %p44 = por %p42, %p43
      %p45 = scmp.ne.s32.totalorder %s34, %s37
      %p46 = scmp.eq.s32.totalorder %s15, 1
      %p47 = por %p45, %p46
      %p48 = scmp.ne.s32.totalorder %s37, %s38
      %p49 = scmp.eq.s32.totalorder %s15, 0
      %p50 = por %p48, %p49
      %p51 = scmp.ne.s32.totalorder %s37, %s38
      %p52 = scmp.eq.s32.totalorder %s16, 1
      %p53 = por %p51, %p52
      %p55 = scmp.ne.s32.totalorder %s38, %s54
      %p56 = scmp.eq.s32.totalorder %s16, 0
      %p57 = por %p55, %p56
      %s58 = ssub.s32 %s17, %s29
      %p59 = scmp.eq.s32.totalorder %s58, 0
      %s61 = sadd.s32 %s60, 1
      %s62 = scalar_select %p59, %s60, %s61
      %p65 = pneg %p59
      %p66 = scmp.eq.s32.totalorder %s10, 1
      %p67 = por %p65, %p66
      %p68 = scmp.ne.s32.totalorder %s60, %s63
      %p69 = scmp.eq.s32.totalorder %s10, 0
      %p70 = por %p68, %p69
      %p71 = scmp.ne.s32.totalorder %s60, %s63
      %p72 = scmp.eq.s32.totalorder %s15, 1
      %p73 = por %p71, %p72
      %p74 = scmp.ne.s32.totalorder %s63, %s64
      %p75 = scmp.eq.s32.totalorder %s15, 0
      %p76 = por %p74, %p75
      %p77 = scmp.ne.s32.totalorder %s63, %s64
      %p78 = scmp.eq.s32.totalorder %s16, 1
      %p79 = por %p77, %p78
      %p81 = scmp.ne.s32.totalorder %s64, %s80
      %p82 = scmp.eq.s32.totalorder %s16, 0
      %p83 = por %p81, %p82
      %p84 = scmp.le.s32.totalorder 1, %s10
      %p85 = scmp.lt.s32.totalorder %s10, 3
      %p86 = pnand %p84, %p85
      %p87 = pneg %p86
      // Predicated region
      $region9: #{tpu_custom_call.1} parent=5 // pred_check
        _
      $region10: #{tpu_custom_call.1} parent=5 // pred_check_branch
        %89 = sbr.rel (%p86) target = $region12
      $region11: #{tpu_custom_call.1} parent=5 // pred_region
        %s90 = ssub.s32 %s10, 1
      $region12: #{tpu_custom_call.1} parent=5 // pred_fallthru
        _
      %p91 = scmp.lt.s32.totalorder %s10, 2
      // Predicated region
      $region13: #{tpu_custom_call.1} parent=5 // pred_check
        %p92 = pneg %p91
      $region14: #{tpu_custom_call.1} parent=5 // pred_check_branch
        %94 = sbr.rel (%p92) target = $region16
      $region15: #{tpu_custom_call.1} parent=5 // pred_region
        // Predicated region
        $region17: #{tpu_custom_call.1} parent=15 // pred_check
          %p95 = pneg %p44
        $region18: #{tpu_custom_call.1} parent=15 // pred_check_branch
          %97 = sbr.rel (%p95) target = $region20
        $region19: #{tpu_custom_call.1} parent=15 // pred_region
          %s98 = sand.u32 %s34, 1
          %s99 = scalar_lea.sflag [#allocation4], %s98
          %s100 = sand.u32 %s34, 1
          %s101 = smul.addr %s100, 8
          %s102 = scalar_lea.vmem [#allocation3], %s101
          %s103 = smul.u32 2, %s18
          %s105 = ssub.s32 128, 128
          %106 = vsyncadd %s99, %s105
          %s107 = smul.addr %s17, 2
          %s108 = sadd.s32 %s103, %s107
          %s109 = smul.addr %s108, 64
          %s110 = scalar_lea.hbm %s0, %s109
          %s112 = sshll.u32 %s102, 4
          %s113 = int_to_ptr.vmem [resolvable:$true] %s112
          %115 = dma.hbm_to_vmem [thread:$0]  %s110, 128, %s113, %s99
        $region20: #{tpu_custom_call.1} parent=15 // pred_fallthru
          _
      $region16: #{tpu_custom_call.1} parent=5 // pred_fallthru
        _
      %p116 = scmp.le.s32.totalorder 1, %s10
      %p117 = scmp.lt.s32.totalorder %s10, 3
      %p118 = pnand %p116, %p117
      %p119 = pneg %p118
      // Predicated region
      $region21: #{tpu_custom_call.1} parent=5 // pred_check
        _
      $region22: #{tpu_custom_call.1} parent=5 // pred_check_branch
        %121 = sbr.rel (%p118) target = $region24
      $region23: #{tpu_custom_call.1} parent=5 // pred_region
        %s122 = ssub.s32 %s10, 1
        %s123 = sand.u32 %s37, 1
        %s124 = scalar_lea.sflag [#allocation4], %s123
        %s125 = sand.u32 %s37, 1
        %s126 = smul.addr %s125, 8
        %s127 = scalar_lea.vmem [#allocation3], %s126
        // Predicated region
        $region25: #{tpu_custom_call.1} parent=23 // pred_check
          %p128 = pneg %p50
        $region26: #{tpu_custom_call.1} parent=23 // pred_check_branch
          %130 = sbr.rel (%p128) target = $region28
        $region27: #{tpu_custom_call.1} parent=23 // pred_region
          %131 = dma.done %s124, 128
        $region28: #{tpu_custom_call.1} parent=23 // pred_fallthru
          _
        %s132 = sand.u32 %s37, 1
        %s133 = scalar_lea.sflag [#allocation4], %s132
        %s134 = sand.u32 %s37, 1
        %s135 = smul.addr %s134, 8
        %s136 = scalar_lea.vmem [#allocation3], %s135
        %p137 = pneg %p50
        %p138 = pneg %p47
        %p139 = pneg %p76
        %p140 = pneg %p73
        %p141 = scmp.lt.s32.totalorder %s19, 1
        %s142 = scalar_select %p141, %s19, 1
        %s143 = scalar_lea.vmem %s1, %s142
        %s144 = smul.u32 2, %s20
        %p145 = scmp.lt.s32.totalorder %s19, 1
        %s146 = scalar_select %p145, %s19, 1
        %s147 = scalar_lea.vmem %s1, %s146
        %p148 = scmp.eq.s32.totalorder %s20, 0
        // Predicated region
        $region29: #{tpu_custom_call.1} parent=23 // pred_check
          %p149 = pneg %p148
        $region30: #{tpu_custom_call.1} parent=23 // pred_check_branch
          %151 = sbr.rel (%p149) target = $region32
        $region31: #{tpu_custom_call.1} parent=23 // pred_region
          %v152 = vlaneseq
          %vm153 = vcmp.ge.s32.totalorder %v152, 0
          %vm154 = vcmp.lt.s32.totalorder %v152, 256
          %vm155 = vmand %vm153, %vm154
          %156 = vst.msk [vmem:[#allocation2] sm:$0x3] %vm155, 0.0
        $region32: #{tpu_custom_call.1} parent=23 // pred_fallthru
          _
        %v157 = vld [vmem:[%s127] sm:$0xff]
        %v159 = vcombine.high %v157, %v157
        %vm161 = vcmask 1043456
        %v162 = vsel %vm161, %v157, -inf
        %v163 = vrot.slane %v162, 4
        %v164 = vmax.f32 %v162, %v163
        %v165 = vrot.slane %v164, 2
        %v166 = vmax.f32 %v164, %v165
        %v167 = vrot.slane %v166, 1
        %v168 = vmax.f32 %v166, %v167
        %v169 = vsel %vm161, %v159, -inf
        %v170 = vrot.slane %v169, 4
        %v171 = vmax.f32 %v169, %v170
        %v172 = vrot.slane %v171, 2
        %v173 = vmax.f32 %v171, %v172
        %v174 = vrot.slane %v173, 1
        %v175 = vmax.f32 %v173, %v174
        %v178 = vcombine.low %v168, %v175
        %v180 = vsub.f32 %v157, %v178
        %v181 = vmul.f32 %v180, 1.442695
        %v182 = vpow.pop %v181
        %v184 = vcombine.high %v182, %v182
        %v186 = vsel %vm161, %v182, 0.0
        %v187 = vrot.slane %v186, 4
        %v188 = vadd.f32 %v186, %v187
        %v189 = vrot.slane %v188, 2
        %v190 = vadd.f32 %v188, %v189
        %v191 = vrot.slane %v190, 1
        %v192 = vadd.f32 %v190, %v191
        %v193 = vsel %vm161, %v184, 0.0
        %v194 = vrot.slane %v193, 4
        %v195 = vadd.f32 %v193, %v194
        %v196 = vrot.slane %v195, 2
        %v197 = vadd.f32 %v195, %v196
        %v198 = vrot.slane %v197, 1
        %v199 = vadd.f32 %v197, %v198
        %v200 = vmul.f32 %v182, %v180
        %v202 = vcombine.high %v200, %v200
        %v204 = vsel %vm161, %v200, 0.0
        %v205 = vrot.slane %v204, 4
        %v206 = vadd.f32 %v204, %v205
        %v207 = vrot.slane %v206, 2
        %v208 = vadd.f32 %v206, %v207
        %v209 = vrot.slane %v208, 1
        %v210 = vadd.f32 %v208, %v209
        %v211 = vsel %vm161, %v202, 0.0
        %v212 = vrot.slane %v211, 4
        %v213 = vadd.f32 %v211, %v212
        %v214 = vrot.slane %v213, 2
        %v215 = vadd.f32 %v213, %v214
        %v216 = vrot.slane %v215, 1
        %v217 = vadd.f32 %v215, %v216
        %v218 = vlog2.pop %v192
        %v219 = vmul.f32 %v218, 0.6931472
        %v220 = vlog2.pop %v199
        %v221 = vmul.f32 %v220, 0.6931472
        %v222 = vrcp.pop %v192
        %v223 = vrcp.pop %v199
        %v224 = vmul.f32 %v210, %v222
        %v225 = vmul.f32 %v217, %v223
        %v226 = vsub.f32 %v219, %v224
        %v227 = vsub.f32 %v221, %v225
        %v228 = vld [vmem:[#allocation2] sm:$0x3]
        %v231 = vcombine.low %v226, %v227
        %v233 = vunpack.c.l.s4 1966171168
        %v234 = vunpack.c.0.s8 %v233
        %v235 = vlaneseq
        %v236 = vshrl.u32 %v235, 7
        %v237 = vsub.s32 %v234, %v236
        %v238 = vrot.slane %v231, %v237
        %v240 = vunpack.c.l.s4 1966171168
        %v241 = vunpack.c.0.s8 %v240
        %v242 = vlaneseq
        %v243 = vshrl.u32 %v242, 7
        %v244 = vsub.s32 %v241, %v243
        %v245 = vrot.slane %v238, %v244
        %v247 = vadd.f32 %v228, %v245
        %v248 = vlaneseq
        %vm249 = vcmp.ge.s32.totalorder %v248, 0
        %vm250 = vcmp.lt.s32.totalorder %v248, 256
        %vm251 = vmand %vm249, %vm250
        %252 = vst.msk [vmem:[#allocation2] sm:$0x3] %vm251, %v247
        // Predicated region
        $region33: #{tpu_custom_call.1} parent=23 // pred_check
          %p253 = pneg %p148
        $region34: #{tpu_custom_call.1} parent=23 // pred_check_branch
          %255 = sbr.rel (%p253) target = $region36
        $region35: #{tpu_custom_call.1} parent=23 // pred_region
          %v256 = vld [vmem:[#allocation2] sm:$0x3]
          %v258 = vlaneseq
          %v259 = vshrl.u32 %v258, 7
          %v260 = vsub.s32 0, %v259
          %v261 = vrot.slane %v256, %v260
          %v262 = vlaneseq
          %v263 = vshrl.u32 %v262, 7
          %v264 = vsub.s32 1, %v263
          %v265 = vrot.slane %v256, %v264
          %vm268 = vcmask 1040384
          %v269 = vsel %vm268, %v261, 0.0
          %v270 = vsel %vm268, %v265, 0.0
          %v271 = vadd.f32 %v269, %v270
          %272 = vadd.xlane.f32.xlu0 %v271
          %v273 = vpop.xlane.xlu0 %272
          %vm274 = vcmask 0
          %275 = vst.msk [vmem:[%s147] sm:$0x1] %vm274, %v273
        $region36: #{tpu_custom_call.1} parent=23 // pred_fallthru
          _
        %p276 = scmp.lt.s32.totalorder %s19, 1
        %s277 = scalar_select %p276, %s19, 1
        %s278 = scalar_lea.vmem %s1, %s277
        // Predicated region
        $region37: #{tpu_custom_call.1} parent=23 // pred_check
          %p279 = pneg %p73
        $region38: #{tpu_custom_call.1} parent=23 // pred_check_branch
          %281 = sbr.rel (%p279) target = $region40
        $region39: #{tpu_custom_call.1} parent=23 // pred_region
          _
        $region40: #{tpu_custom_call.1} parent=23 // pred_fallthru
          _
      $region24: #{tpu_custom_call.1} parent=5 // pred_fallthru
        _
      %p282 = scmp.le.s32.totalorder 2, %s10
      // Predicated region
      $region41: #{tpu_custom_call.1} parent=5 // pred_check
        %p283 = pneg %p282
      $region42: #{tpu_custom_call.1} parent=5 // pred_check_branch
        %285 = sbr.rel (%p283) target = $region44
      $region43: #{tpu_custom_call.1} parent=5 // pred_region
        %s286 = ssub.s32 %s10, 2
        // Predicated region
        $region45: #{tpu_custom_call.1} parent=43 // pred_check
          %p287 = pneg %p79
        $region46: #{tpu_custom_call.1} parent=43 // pred_check_branch
          %289 = sbr.rel (%p287) target = $region48
        $region47: #{tpu_custom_call.1} parent=43 // pred_region
          %p290 = scmp.lt.s32.totalorder %s21, 1
          %s291 = scalar_select %p290, %s21, 1
          %s292 = scalar_lea.vmem %s1, %s291
        $region48: #{tpu_custom_call.1} parent=43 // pred_fallthru
          _
      $region44: #{tpu_custom_call.1} parent=5 // pred_fallthru
        _
    $region6: #{tpu_custom_call.1} parent=1 // loop_footer
      %s14 = sadd.s32 1, %s10
    $region7: #{tpu_custom_call.1} parent=1 // loop_footer_branch
      %9 = sbr.rel target = $region3
    $region8: #{tpu_custom_call.1} parent=1 // loop_exit
      _
    %293 = vsyncpa [#allocation4], 1
    %s294 = scalar_lea.sflag [#allocation4], 1
    %295 = vsyncpa %s294, 1

</llo_original>
